<compile_context>
chip_gen: v6e
topology: v6e:2x2x1
jax: 0.10.0
libtpu: 0.0.40
codegen_flags: <defaults>
</compile_context>

<pallas_src>
import numpy as np
import jax
import jax.numpy as jnp
from jax import lax
from jax.experimental import pallas as pl
from jax.experimental.pallas import tpu as pltpu

C1_OUT = 10      # conv1 out channels
K1 = 10          # conv1 temporal kernel
C12_OUT = 20     # conv1_2 out channels
C2_OUT = 5       # conv2 out channels
K2 = 4           # conv2 temporal kernel
P1_K, P1_S = 12, 4   # AvgPool2d((1,12), stride (1,4))
P2_K, P2_S = 6, 2    # AvgPool2d((1,6),  stride (1,2))
BN_EPS = 1e-5

MATMUL_DTYPE = jnp.bfloat16   # MXU operand dtype (f32 accumulate)


def _elu(y):
    # safe ELU: never feeds large positive values to exp()
    return jnp.where(y > 0, y, jnp.exp(jnp.minimum(y, 0.0)) - 1.0)


# ---------------------------------------------------------------------------
# Pallas kernel: whole T_Backbone_test forward for one (region, batch-tile).
# Activations are 2-D (channels [sublane], Bt*time [lane]) f32 tiles; the time
# columns of sample b live at lane offset b*T_stage.
# ---------------------------------------------------------------------------
def _backbone_kernel(x_ref, wc_ref, bc_ref, w2_ref, t2_ref,
                     psel1_ref, psel2_ref, out_ref):
    xf = x_ref[0, 0]                         # (ch, Bt*T) f32, column = b*T + t
    m1 = psel1_ref.shape[0]                  # Bt*T - K1 + 1

    # im2col for the fused conv1 (x) conv1_2 matmul; row order = k*ch + e.
    imc1 = jnp.concatenate([xf[:, k:k + m1] for k in range(K1)], axis=0)

    # fused conv1 + conv1_2 (+ BN1 scale folded into wc) -> shift -> ELU
    y1 = jnp.dot(wc_ref[0], imc1.astype(MATMUL_DTYPE),
                 preferred_element_type=jnp.float32) + bc_ref[0]
    y1 = _elu(y1)                            # (20, Bt*T - K1 + 1) f32

    # avg-pool 1 + selection of the valid (non batch-crossing) conv columns
    p1 = jnp.dot(y1.astype(MATMUL_DTYPE), psel1_ref[...],
                 preferred_element_type=jnp.float32)          # (20, Bt*L1)
    # TODO(synk): F.dropout in the reference is stochastic (training default); identity here.

    m2 = psel2_ref.shape[0]                  # Bt*L1 - K2 + 1
    # im2col for conv2; row order = k*C12_OUT + c.
    imc2 = jnp.concatenate([p1[:, k:k + m2] for k in range(K2)], axis=0)

    # conv2 (+ BN2 scale folded into w2) -> shift -> ELU
    y2 = jnp.dot(w2_ref[0], imc2.astype(MATMUL_DTYPE),
                 preferred_element_type=jnp.float32) + t2_ref[0]
    y2 = _elu(y2)                            # (5, Bt*L1 - K2 + 1) f32

    # avg-pool 2 + valid-column selection
    out_ref[0, 0] = jnp.dot(y2.astype(MATMUL_DTYPE), psel2_ref[...],
                            preferred_element_type=jnp.float32)  # (5, Bt*L2)


# ---------------------------------------------------------------------------
# Glue: parameter folding + pallas_call wrapper.
# ---------------------------------------------------------------------------
def _select_pool_matrix(bt, n_in, conv_k, pool_k, pool_s, n_out):
    """(bt*n_in - conv_k + 1, bt*n_out) matrix: picks the valid conv-output
    columns of a batch-lane-folded im2col and applies average pooling."""
    m = bt * n_in - conv_k + 1
    rows = jnp.arange(m)[:, None]
    b = jnp.repeat(jnp.arange(bt), n_out)
    l = jnp.tile(jnp.arange(n_out), bt)
    start = (b * n_in + l * pool_s)[None, :]
    mask = (rows >= start) & (rows < start + pool_k)
    return mask.astype(jnp.float32) / float(pool_k)


def init_backbone_params(ch, key):
    ks = jax.random.split(key, 12)
    return dict(
        w1=0.1 * jax.random.normal(ks[0], (C1_OUT, 1, 1, K1), jnp.float32),
        b1=0.1 * jax.random.normal(ks[1], (C1_OUT,), jnp.float32),
        w12=0.1 * jax.random.normal(ks[2], (C12_OUT, C1_OUT, ch, 1), jnp.float32),
        b12=0.1 * jax.random.normal(ks[3], (C12_OUT,), jnp.float32),
        w2=0.1 * jax.random.normal(ks[4], (C2_OUT, C12_OUT, 1, K2), jnp.float32),
        gamma1=1.0 + 0.1 * jax.random.normal(ks[5], (C12_OUT,), jnp.float32),
        beta1=0.1 * jax.random.normal(ks[6], (C12_OUT,), jnp.float32),
        mean1=0.1 * jax.random.normal(ks[7], (C12_OUT,), jnp.float32),
        var1=jax.random.uniform(ks[8], (C12_OUT,), jnp.float32, 0.5, 1.5),
        gamma2=1.0 + 0.1 * jax.random.normal(ks[9], (C2_OUT,), jnp.float32),
        beta2=0.1 * jax.random.normal(ks[10], (C2_OUT,), jnp.float32),
        mean2=jnp.zeros((C2_OUT,), jnp.float32),
        var2=jax.random.uniform(ks[11], (C2_OUT,), jnp.float32, 0.5, 1.5),
    )


def _fold_backbone_params(p):
    """Fold conv1/conv1_2/conv2 and the inference BatchNorm scales into two
    matmul weights + additive shifts (exact algebra)."""
    s1 = p['gamma1'] / jnp.sqrt(p['var1'] + BN_EPS)
    sh1 = p['beta1'] - p['mean1'] * s1
    w12_2d = p['w12'][..., 0]                      # (20, 10, ch)
    w1_2d = p['w1'][:, 0, 0, :]                    # (10, K1)
    ch = w12_2d.shape[-1]
    w_comb = jnp.einsum('oce,ck->oke', w12_2d, w1_2d).reshape(C12_OUT, K1 * ch)
    b_comb = p['b12'] + jnp.einsum('oce,c->o', w12_2d, p['b1'])
    wc = s1[:, None] * w_comb                      # conv1 (x) conv1_2 (x) BN1-scale
    bc = (s1 * b_comb + sh1)[:, None]              # (20, 1) additive shift

    s2 = p['gamma2'] / jnp.sqrt(p['var2'] + BN_EPS)
    sh2 = p['beta2'] - p['mean2'] * s2
    w2f = (s2[:, None, None]
           * jnp.transpose(p['w2'][:, :, 0, :], (0, 2, 1))).reshape(C2_OUT, K2 * C12_OUT)
    t2 = sh2[:, None]                              # (5, 1)
    return wc, bc, w2f, t2


def regions_forward_pallas(x_regions, params_list, bt=None):
    """x_regions: (R, B, ch, T) -> (R, B, C2_OUT * L2); one pallas_call for all
    regions (grid = (regions, batch-tiles))."""
    R, B, ch, T = x_regions.shape
    T1 = T - K1 + 1
    L1 = (T1 - P1_K) // P1_S + 1
    T2 = L1 - K2 + 1
    L2 = (T2 - P2_K) // P2_S + 1

    # Batch tile size: amortizes per-grid-step overhead and fills the matmul
    # lane/N dimension.  Kept modest (<=8) because the selection/pool matrices
    # grow ~Bt^2, keeping tiles well inside v7x's 64 MiB VMEM.
    if bt is None:
        bt = min(B, 8)
    nb = -(-B // bt)
    b_pad = nb * bt

    x = x_regions.astype(jnp.float32)
    if b_pad != B:
        x = jnp.concatenate(
            [x, jnp.zeros((R, b_pad - B, ch, T), jnp.float32)], axis=1)
    # fold each batch tile into the lane axis: (R, nb, ch, bt*T), column = b*T + t
    x_fold = x.reshape(R, nb, bt, ch, T).transpose(0, 1, 3, 2, 4).reshape(
        R, nb, ch, bt * T)

    folded = [_fold_backbone_params(p) for p in params_list]
    wc = jnp.stack([f[0] for f in folded]).astype(MATMUL_DTYPE)   # (R, 20, K1*ch)
    bc = jnp.stack([f[1] for f in folded])                        # (R, 20, 1) f32
    w2 = jnp.stack([f[2] for f in folded]).astype(MATMUL_DTYPE)   # (R, 5, K2*20)
    t2 = jnp.stack([f[3] for f in folded])                        # (R, 5, 1) f32

    psel1 = _select_pool_matrix(bt, T, K1, P1_K, P1_S, L1).astype(MATMUL_DTYPE)
    psel2 = _select_pool_matrix(bt, L1, K2, P2_K, P2_S, L2).astype(MATMUL_DTYPE)

    out = pl.pallas_call(
        _backbone_kernel,
        out_shape=jax.ShapeDtypeStruct((R, nb, C2_OUT, bt * L2), jnp.float32),
        grid=(R, nb),   # batch-tile axis innermost -> weights re-DMA only on region change
        in_specs=[
            pl.BlockSpec((1, 1, ch, bt * T), lambda r, i: (r, i, 0, 0)),
            pl.BlockSpec((1, C12_OUT, K1 * ch), lambda r, i: (r, 0, 0)),
            pl.BlockSpec((1, C12_OUT, 1), lambda r, i: (r, 0, 0)),
            pl.BlockSpec((1, C2_OUT, K2 * C12_OUT), lambda r, i: (r, 0, 0)),
            pl.BlockSpec((1, C2_OUT, 1), lambda r, i: (r, 0, 0)),
            pl.BlockSpec((bt * T - K1 + 1, bt * L1), lambda r, i: (0, 0)),
            pl.BlockSpec((bt * L1 - K2 + 1, bt * L2), lambda r, i: (0, 0)),
        ],
        out_specs=pl.BlockSpec((1, 1, C2_OUT, bt * L2), lambda r, i: (r, i, 0, 0)),
        compiler_params=pltpu.CompilerParams(
            dimension_semantics=("parallel", "parallel")),
    )(x_fold, wc, bc, w2, t2, psel1, psel2)

    # un-fold the lane-packed batch: (R, nb, 5, bt*L2) -> (R, B, 5*L2)
    out = out.reshape(R, nb, C2_OUT, bt, L2).transpose(0, 1, 3, 2, 4)
    return out.reshape(R, b_pad, C2_OUT * L2)[:, :B]


class TemporalLocalConvPallas:
    """Pallas equivalent of Temporal_Local_Conv (inference)."""

    def __init__(self, division, ch, key):
        self.division = division
        self.params = {}
        for i in division.keys():
            key, sub = jax.random.split(key)
            self.params[i] = init_backbone_params(ch, sub)

    def __call__(self, x):
        keys = list(self.division.keys())
        idx = [jnp.asarray(self.division[k]) for k in keys]
        lengths = [int(i.shape[0]) for i in idx]
        if len(set(lengths)) == 1:
            # common case: all regions same length -> single fused pallas_call
            x_regions = jnp.stack([x[:, :, i] for i in idx], axis=0)
            outs = regions_forward_pallas(
                x_regions, [self.params[k] for k in keys])
            return [outs[r][:, None, :] for r in range(len(keys))]
        # fallback: regions of different lengths -> one call per region (R=1)
        res = []
        for k, i in zip(keys, idx):
            o = regions_forward_pallas(x[:, :, i][None], [self.params[k]])
            res.append(o[0][:, None, :])
        return res


# ---------------------------------------------------------------------------
# Plain-JAX reference (XLA convs / reduce_window) for a correctness check.
# ---------------------------------------------------------------------------
def _bn(y, g, b, m, v):
    sc = (g / jnp.sqrt(v + BN_EPS))[None, :, None, None]
    return (y - m[None, :, None, None]) * sc + b[None, :, None, None]


def _avgpool(y, k, s):
    acc = lax.reduce_window(y, 0.0, lax.add, (1, 1, 1, k), (1, 1, 1, s), 'VALID')
    return acc / k


def backbone_reference(x, p):
    dn = ('NCHW', 'OIHW', 'NCHW')
    hp = lax.Precision.HIGHEST
    y = x[:, None, :, :]
    y = lax.conv_general_dilated(y, p['w1'], (1, 1), 'VALID',
                                 dimension_numbers=dn, precision=hp)
    y = y + p['b1'][None, :, None, None]
    y = lax.conv_general_dilated(y, p['w12'], (1, 1), 'VALID',
                                 dimension_numbers=dn, precision=hp)
    y = y + p['b12'][None, :, None, None]
    y = _avgpool(_elu(_bn(y, p['gamma1'], p['beta1'], p['mean1'], p['var1'])), P1_K, P1_S)
    y = lax.conv_general_dilated(y, p['w2'], (1, 1), 'VALID',
                                 dimension_numbers=dn, precision=hp)
    y = _avgpool(_elu(_bn(y, p['gamma2'], p['beta2'], p['mean2'], p['var2'])), P2_K, P2_S)
    return y.reshape(x.shape[0], -1)


if __name__ == "__main__":
    key = jax.random.PRNGKey(0)
    # Each time-region needs ~96 samples so the final reshape(-1, 5*6) is well
    # defined (L2 == 6); two 96-sample regions out of T = 192.
    B, C, T = 2, 4, 192
    division = {'1': list(range(0, 96)), '2': list(range(96, 192))}

    k_x, k_p = jax.random.split(key)
    x = jax.random.normal(k_x, (B, C, T), jnp.float32)

    model = TemporalLocalConvPallas(division, C, k_p)
    outs = model(x)
    outs = [jax.block_until_ready(o) for o in outs]

    for idx, i in enumerate(division.keys()):
        region = x[:, :, jnp.array(division[i])]
        ref = np.asarray(backbone_reference(region, model.params[i]))[:, None, :]
        got = np.asarray(outs[idx])
        assert got.shape == (B, 1, C2_OUT * 6), got.shape
        np.testing.assert_allclose(got, ref, rtol=2e-2, atol=2e-2)

    print("KERNEL_OK")
</pallas_src>

<mosaic_0001>
module attributes {stable_mosaic.version = 11 : i64} {
  func.func @_backbone_kernel(%arg0: i32, %arg1: i32, %arg2: memref<1x1x4x192xf32, #tpu.memory_space<vmem>>, %arg3: memref<1x20x40xbf16, #tpu.memory_space<vmem>>, %arg4: memref<1x20x1xf32, #tpu.memory_space<vmem>>, %arg5: memref<1x5x80xbf16, #tpu.memory_space<vmem>>, %arg6: memref<1x5x1xf32, #tpu.memory_space<vmem>>, %arg7: memref<183x38xbf16, #tpu.memory_space<vmem>>, %arg8: memref<35x12xbf16, #tpu.memory_space<vmem>>, %arg9: memref<1x1x5x12xf32, #tpu.memory_space<vmem>>) attributes {dimension_semantics = [#tpu.dimension_semantics<parallel>, #tpu.dimension_semantics<parallel>], iteration_bounds = array<i64: 2, 1>, scalar_prefetch = 0 : i64, scratch_operands = 0 : i64, tpu.core_type = #tpu.core_type<tc>, window_params = [{transform_indices = @transform_0, window_bounds = array<i64: 1, 1, 4, 192>}, {transform_indices = @transform_1, window_bounds = array<i64: 1, 20, 40>}, {transform_indices = @transform_2, window_bounds = array<i64: 1, 20, 1>}, {transform_indices = @transform_3, window_bounds = array<i64: 1, 5, 80>}, {transform_indices = @transform_4, window_bounds = array<i64: 1, 5, 1>}, {pipeline_mode = #tpu.pipeline_mode<synchronous>, transform_indices = @transform_5, window_bounds = array<i64: 183, 38>}, {pipeline_mode = #tpu.pipeline_mode<synchronous>, transform_indices = @transform_6, window_bounds = array<i64: 35, 12>}, {transform_indices = @transform_7, window_bounds = array<i64: 1, 1, 5, 12>}]} {
    %c0 = arith.constant 0 : index
    %c0_0 = arith.constant 0 : index
    %c0_1 = arith.constant 0 : index
    %c0_2 = arith.constant 0 : index
    %0 = vector.load %arg2[%c0, %c0_0, %c0_1, %c0_2] : memref<1x1x4x192xf32, #tpu.memory_space<vmem>>, vector<1x1x4x192xf32>
    %1 = vector.shape_cast %0 : vector<1x1x4x192xf32> to vector<4x192xf32>
    %2 = vector.extract_strided_slice %1 {offsets = [0, 0], sizes = [4, 183], strides = [1, 1]} : vector<4x192xf32> to vector<4x183xf32>
    %3 = vector.extract_strided_slice %1 {offsets = [0, 1], sizes = [4, 183], strides = [1, 1]} : vector<4x192xf32> to vector<4x183xf32>
    %4 = vector.extract_strided_slice %1 {offsets = [0, 2], sizes = [4, 183], strides = [1, 1]} : vector<4x192xf32> to vector<4x183xf32>
    %5 = vector.extract_strided_slice %1 {offsets = [0, 3], sizes = [4, 183], strides = [1, 1]} : vector<4x192xf32> to vector<4x183xf32>
    %6 = vector.extract_strided_slice %1 {offsets = [0, 4], sizes = [4, 183], strides = [1, 1]} : vector<4x192xf32> to vector<4x183xf32>
    %7 = vector.extract_strided_slice %1 {offsets = [0, 5], sizes = [4, 183], strides = [1, 1]} : vector<4x192xf32> to vector<4x183xf32>
    %8 = vector.extract_strided_slice %1 {offsets = [0, 6], sizes = [4, 183], strides = [1, 1]} : vector<4x192xf32> to vector<4x183xf32>
    %9 = vector.extract_strided_slice %1 {offsets = [0, 7], sizes = [4, 183], strides = [1, 1]} : vector<4x192xf32> to vector<4x183xf32>
    %10 = vector.extract_strided_slice %1 {offsets = [0, 8], sizes = [4, 183], strides = [1, 1]} : vector<4x192xf32> to vector<4x183xf32>
    %11 = vector.extract_strided_slice %1 {offsets = [0, 9], sizes = [4, 183], strides = [1, 1]} : vector<4x192xf32> to vector<4x183xf32>
    %12 = tpu.concatenate %2, %3, %4, %5, %6, %7, %8, %9, %10, %11 in 0 : vector<4x183xf32>, vector<4x183xf32>, vector<4x183xf32>, vector<4x183xf32>, vector<4x183xf32>, vector<4x183xf32>, vector<4x183xf32>, vector<4x183xf32>, vector<4x183xf32>, vector<4x183xf32> -> vector<40x183xf32>
    %c0_3 = arith.constant 0 : index
    %c0_4 = arith.constant 0 : index
    %c0_5 = arith.constant 0 : index
    %13 = vector.load %arg3[%c0_3, %c0_4, %c0_5] : memref<1x20x40xbf16, #tpu.memory_space<vmem>>, vector<1x20x40xbf16>
    %14 = vector.shape_cast %13 : vector<1x20x40xbf16> to vector<20x40xbf16>
    %15 = arith.truncf %12 : vector<40x183xf32> to vector<40x183xbf16>
    %cst = arith.constant dense<0.000000e+00> : vector<20x183xf32>
    %16 = tpu.matmul %14, %15, %cst {dimension_numbers = #tpu.dot_dimension_numbers<[1], [0], [0], [1], [0, 0, 1, 1], [], []>} : vector<20x40xbf16>, vector<40x183xbf16>, vector<20x183xf32> -> vector<20x183xf32>
    %c0_6 = arith.constant 0 : index
    %c0_7 = arith.constant 0 : index
    %c0_8 = arith.constant 0 : index
    %17 = vector.load %arg4[%c0_6, %c0_7, %c0_8] : memref<1x20x1xf32, #tpu.memory_space<vmem>>, vector<1x20x1xf32>
    %18 = vector.shape_cast %17 : vector<1x20x1xf32> to vector<20x1xf32>
    %19 = vector.broadcast %18 : vector<20x1xf32> to vector<20x183xf32>
    %20 = arith.addf %16, %19 : vector<20x183xf32>
    %cst_9 = arith.constant 0.000000e+00 : f32
    %21 = vector.broadcast %cst_9 : f32 to vector<20x183xf32>
    %22 = arith.cmpf ogt, %20, %21 : vector<20x183xf32>
    %cst_10 = arith.constant 0.000000e+00 : f32
    %23 = vector.broadcast %cst_10 : f32 to vector<20x183xf32>
    %24 = arith.minimumf %20, %23 : vector<20x183xf32>
    %25 = math.exp %24 : vector<20x183xf32>
    %cst_11 = arith.constant 1.000000e+00 : f32
    %26 = vector.broadcast %cst_11 : f32 to vector<20x183xf32>
    %27 = arith.subf %25, %26 : vector<20x183xf32>
    %28 = arith.select %22, %20, %27 : vector<20x183xi1>, vector<20x183xf32>
    %29 = arith.truncf %28 : vector<20x183xf32> to vector<20x183xbf16>
    %c0_12 = arith.constant 0 : index
    %c0_13 = arith.constant 0 : index
    %30 = vector.load %arg7[%c0_12, %c0_13] : memref<183x38xbf16, #tpu.memory_space<vmem>>, vector<183x38xbf16>
    %cst_14 = arith.constant dense<0.000000e+00> : vector<20x38xf32>
    %31 = tpu.matmul %29, %30, %cst_14 {dimension_numbers = #tpu.dot_dimension_numbers<[1], [0], [0], [1], [0, 0, 1, 1], [], []>} : vector<20x183xbf16>, vector<183x38xbf16>, vector<20x38xf32> -> vector<20x38xf32>
    %32 = vector.extract_strided_slice %31 {offsets = [0, 0], sizes = [20, 35], strides = [1, 1]} : vector<20x38xf32> to vector<20x35xf32>
    %33 = vector.extract_strided_slice %31 {offsets = [0, 1], sizes = [20, 35], strides = [1, 1]} : vector<20x38xf32> to vector<20x35xf32>
    %34 = vector.extract_strided_slice %31 {offsets = [0, 2], sizes = [20, 35], strides = [1, 1]} : vector<20x38xf32> to vector<20x35xf32>
    %35 = vector.extract_strided_slice %31 {offsets = [0, 3], sizes = [20, 35], strides = [1, 1]} : vector<20x38xf32> to vector<20x35xf32>
    %36 = tpu.concatenate %32, %33, %34, %35 in 0 : vector<20x35xf32>, vector<20x35xf32>, vector<20x35xf32>, vector<20x35xf32> -> vector<80x35xf32>
    %c0_15 = arith.constant 0 : index
    %c0_16 = arith.constant 0 : index
    %c0_17 = arith.constant 0 : index
    %37 = vector.load %arg5[%c0_15, %c0_16, %c0_17] : memref<1x5x80xbf16, #tpu.memory_space<vmem>>, vector<1x5x80xbf16>
    %38 = vector.shape_cast %37 : vector<1x5x80xbf16> to vector<5x80xbf16>
    %39 = arith.truncf %36 : vector<80x35xf32> to vector<80x35xbf16>
    %cst_18 = arith.constant dense<0.000000e+00> : vector<5x35xf32>
    %40 = tpu.matmul %38, %39, %cst_18 {dimension_numbers = #tpu.dot_dimension_numbers<[1], [0], [0], [1], [0, 0, 1, 1], [], []>} : vector<5x80xbf16>, vector<80x35xbf16>, vector<5x35xf32> -> vector<5x35xf32>
    %c0_19 = arith.constant 0 : index
    %c0_20 = arith.constant 0 : index
    %c0_21 = arith.constant 0 : index
    %41 = vector.load %arg6[%c0_19, %c0_20, %c0_21] : memref<1x5x1xf32, #tpu.memory_space<vmem>>, vector<1x5x1xf32>
    %42 = vector.shape_cast %41 : vector<1x5x1xf32> to vector<5x1xf32>
    %43 = vector.broadcast %42 : vector<5x1xf32> to vector<5x35xf32>
    %44 = arith.addf %40, %43 : vector<5x35xf32>
    %cst_22 = arith.constant 0.000000e+00 : f32
    %45 = vector.broadcast %cst_22 : f32 to vector<5x35xf32>
    %46 = arith.cmpf ogt, %44, %45 : vector<5x35xf32>
    %cst_23 = arith.constant 0.000000e+00 : f32
    %47 = vector.broadcast %cst_23 : f32 to vector<5x35xf32>
    %48 = arith.minimumf %44, %47 : vector<5x35xf32>
    %49 = math.exp %48 : vector<5x35xf32>
    %cst_24 = arith.constant 1.000000e+00 : f32
    %50 = vector.broadcast %cst_24 : f32 to vector<5x35xf32>
    %51 = arith.subf %49, %50 : vector<5x35xf32>
    %52 = arith.select %46, %44, %51 : vector<5x35xi1>, vector<5x35xf32>
    %53 = arith.truncf %52 : vector<5x35xf32> to vector<5x35xbf16>
    %c0_25 = arith.constant 0 : index
    %c0_26 = arith.constant 0 : index
    %54 = vector.load %arg8[%c0_25, %c0_26] : memref<35x12xbf16, #tpu.memory_space<vmem>>, vector<35x12xbf16>
    %cst_27 = arith.constant dense<0.000000e+00> : vector<5x12xf32>
    %55 = tpu.matmul %53, %54, %cst_27 {dimension_numbers = #tpu.dot_dimension_numbers<[1], [0], [0], [1], [0, 0, 1, 1], [], []>} : vector<5x35xbf16>, vector<35x12xbf16>, vector<5x12xf32> -> vector<5x12xf32>
    %c0_28 = arith.constant 0 : index
    %c0_29 = arith.constant 0 : index
    %c0_30 = arith.constant 0 : index
    %c0_31 = arith.constant 0 : index
    %56 = vector.load %arg9[%c0_28, %c0_29, %c0_30, %c0_31] : memref<1x1x5x12xf32, #tpu.memory_space<vmem>>, vector<1x1x5x12xf32>
    %57 = vector.shape_cast %56 : vector<1x1x5x12xf32> to vector<5x12xf32>
    %58 = vector.shape_cast %55 : vector<5x12xf32> to vector<1x1x5x12xf32>
    tpu.vector_store %arg9[%c0_28, %c0_29, %c0_30, %c0_31], %58 {strides = array<i32>} : memref<1x1x5x12xf32, #tpu.memory_space<vmem>>, vector<1x1x5x12xf32>,
    return
  }
  func.func @transform_0(%arg0: i32, %arg1: i32) -> (i32, i32, i32, i32) {
    %c0_i32 = arith.constant 0 : i32
    %c0_i32_0 = arith.constant 0 : i32
    %c0_i32_1 = arith.constant 0 : i32
    return %arg0, %arg1, %c0_i32, %c0_i32_0 : i32, i32, i32, i32
  }
  func.func @transform_1(%arg0: i32, %arg1: i32) -> (i32, i32, i32) {
    %c0_i32 = arith.constant 0 : i32
    %c0_i32_0 = arith.constant 0 : i32
    %c0_i32_1 = arith.constant 0 : i32
    return %arg0, %c0_i32, %c0_i32_0 : i32, i32, i32
  }
  func.func @transform_2(%arg0: i32, %arg1: i32) -> (i32, i32, i32) {
    %c0_i32 = arith.constant 0 : i32
    %c0_i32_0 = arith.constant 0 : i32
    %c0_i32_1 = arith.constant 0 : i32
    return %arg0, %c0_i32, %c0_i32_0 : i32, i32, i32
  }
  func.func @transform_3(%arg0: i32, %arg1: i32) -> (i32, i32, i32) {
    %c0_i32 = arith.constant 0 : i32
    %c0_i32_0 = arith.constant 0 : i32
    %c0_i32_1 = arith.constant 0 : i32
    return %arg0, %c0_i32, %c0_i32_0 : i32, i32, i32
  }
  func.func @transform_4(%arg0: i32, %arg1: i32) -> (i32, i32, i32) {
    %c0_i32 = arith.constant 0 : i32
    %c0_i32_0 = arith.constant 0 : i32
    %c0_i32_1 = arith.constant 0 : i32
    return %arg0, %c0_i32, %c0_i32_0 : i32, i32, i32
  }
  func.func @transform_5(%arg0: i32, %arg1: i32) -> (i32, i32) {
    %c0_i32 = arith.constant 0 : i32
    %c0_i32_0 = arith.constant 0 : i32
    %c0_i32_1 = arith.constant 0 : i32
    return %c0_i32, %c0_i32_0 : i32, i32
  }
  func.func @transform_6(%arg0: i32, %arg1: i32) -> (i32, i32) {
    %c0_i32 = arith.constant 0 : i32
    %c0_i32_0 = arith.constant 0 : i32
    %c0_i32_1 = arith.constant 0 : i32
    return %c0_i32, %c0_i32_0 : i32, i32
  }
  func.func @transform_7(%arg0: i32, %arg1: i32) -> (i32, i32, i32, i32) {
    %c0_i32 = arith.constant 0 : i32
    %c0_i32_0 = arith.constant 0 : i32
    %c0_i32_1 = arith.constant 0 : i32
    return %arg0, %arg1, %c0_i32, %c0_i32_0 : i32, i32, i32, i32
  }
}

</mosaic_0001>

<llo_original>
// kernel: tpu_custom_call.1
$region0: #{tpu_custom_call.1}
  #allocation0 [shape = 'u32[]', space=smem, size = 0x4, offset = 0x4, fixed_abs, tag = 'smem constant byte address 0x4 - core index']
  #allocation1 [shape = 'u32[144,128]{1,0:T(1,128)}', space=vmem, size = 0x12000, scoped, tag = 'internal scratch']
  %s0 = inlined_call_operand.vmem [shape: f32[2,1,4,192], index: 0, kind: input, shape index: {}]
  %s1 = inlined_call_operand.vmem [shape: bf16[2,20,40], index: 1, kind: input, shape index: {}]
  %s2 = inlined_call_operand.vmem [shape: f32[2,20,1], index: 2, kind: input, shape index: {}]
  %s3 = inlined_call_operand.vmem [shape: bf16[2,5,80], index: 3, kind: input, shape index: {}]
  %s4 = inlined_call_operand.vmem [shape: f32[2,5,1], index: 4, kind: input, shape index: {}]
  %s5 = inlined_call_operand.vmem [shape: bf16[183,38], index: 5, kind: input, shape index: {}]
  %s6 = inlined_call_operand.vmem [shape: bf16[35,12], index: 6, kind: input, shape index: {}]
  %s7 = inlined_call_operand.vmem [shape: f32[2,1,5,12], index: 7, kind: output, shape index: {}]
  %s8 = sld [smem:[#allocation0]]
  $region61: #{tpu_custom_call.1} parent=0
    _
  %s10 = ssub.s32 1, %s8
  %s11 = scalar_select 0, %s10, %s8
  loop: start=0, step=1, limit=4
  $region2: #{tpu_custom_call.1} parent=0 // loop_pre_header
    _
  $region3: #{tpu_custom_call.1} parent=0 // loop_header
    %s13 = sphi 0, %s17
    %p14 = scmp.ge.s32.totalorder %s13, 4
    %s20 = sphi 0, %s32
    %s21 = sphi 0, %s28
    %s22 = sphi 0, %s20
    %s23 = sphi 0, %s21
    %s24 = sphi 0, %s22
    %s25 = sphi 0, %s23
    %s37 = sphi 0, %s39
    %s40 = sphi 0, %s37
    %s41 = sphi 0, %s40
    %s57 = sphi 0, %s41
    %s63 = sphi 0, %s65
    %s66 = sphi 0, %s63
    %s67 = sphi 0, %s66
    %s83 = sphi 0, %s67
    %s89 = sphi 0, %s91
    %s92 = sphi 0, %s89
    %s93 = sphi 0, %s92
    %s109 = sphi 0, %s93
    %s115 = sphi 0, %s117
    %s118 = sphi 0, %s115
    %s119 = sphi 0, %s118
    %s135 = sphi 0, %s119
    %s141 = sphi 0, %s143
    %s144 = sphi 0, %s141
    %s145 = sphi 0, %s144
    %s161 = sphi 0, %s145
    %s165 = sphi 0, %s165
    %s167 = sphi 0, %s165
    %s168 = sphi 0, %s167
    %s182 = sphi 0, %s168
    %s186 = sphi 0, %s186
    %s188 = sphi 0, %s186
    %s189 = sphi 0, %s188
    %s203 = sphi 0, %s189
    %s211 = sphi 0, %s213
    %s214 = sphi 0, %s211
    %s215 = sphi 0, %s214
    %s231 = sphi 0, %s215
  $region4: #{tpu_custom_call.1} parent=0 // loop_header_branch
    %16 = sbr.rel (%p14) target = $region8
  $region5: #{tpu_custom_call.1} parent=0 // loop_body
    %s18 = ssub.s32 %s13, 1
    %s19 = ssub.s32 %s13, 2
    %s26 = sadd.s32 1, %s21
    %p27 = scmp.ge.s32.totalorder %s26, 1
    %s28 = scalar_select %p27, 0, %s26
    %s29 = sadd.s32 1, %s20
    %s30 = scalar_select %p27, %s29, %s20
    %p31 = scmp.ge.s32.totalorder %s30, 2
    %s32 = scalar_select %p31, 0, %s30
    %s33 = ssub.s32 %s20, %s32
    %s34 = ssub.s32 %s21, %s28
    %s35 = sor.u32 %s33, %s34
    %p36 = scmp.eq.s32.totalorder %s35, 0
    %s38 = sadd.s32 %s37, 1
    %s39 = scalar_select %p36, %s37, %s38
    %p42 = pneg %p36
    %p43 = scmp.eq.s32.totalorder %s13, 1
    %p44 = por %p42, %p43
    %p45 = scmp.ne.s32.totalorder %s37, %s40
    %p46 = scmp.eq.s32.totalorder %s13, 0
    %p47 = por %p45, %p46
    %p48 = scmp.ne.s32.totalorder %s37, %s40
    %p49 = scmp.eq.s32.totalorder %s18, 1
    %p50 = por %p48, %p49
    %p51 = scmp.ne.s32.totalorder %s40, %s41
    %p52 = scmp.eq.s32.totalorder %s18, 0
    %p53 = por %p51, %p52
    %p54 = scmp.ne.s32.totalorder %s40, %s41
    %p55 = scmp.eq.s32.totalorder %s19, 1
    %p56 = por %p54, %p55
    %p58 = scmp.ne.s32.totalorder %s41, %s57
    %p59 = scmp.eq.s32.totalorder %s19, 0
    %p60 = por %p58, %p59
    %s61 = ssub.s32 %s20, %s32
    %p62 = scmp.eq.s32.totalorder %s61, 0
    %s64 = sadd.s32 %s63, 1
    %s65 = scalar_select %p62, %s63, %s64
    %p68 = pneg %p62
    %p69 = scmp.eq.s32.totalorder %s13, 1
    %p70 = por %p68, %p69
    %p71 = scmp.ne.s32.totalorder %s63, %s66
    %p72 = scmp.eq.s32.totalorder %s13, 0
    %p73 = por %p71, %p72
    %p74 = scmp.ne.s32.totalorder %s63, %s66
    %p75 = scmp.eq.s32.totalorder %s18, 1
    %p76 = por %p74, %p75
    %p77 = scmp.ne.s32.totalorder %s66, %s67
    %p78 = scmp.eq.s32.totalorder %s18, 0
    %p79 = por %p77, %p78
    %p80 = scmp.ne.s32.totalorder %s66, %s67
    %p81 = scmp.eq.s32.totalorder %s19, 1
    %p82 = por %p80, %p81
    %p84 = scmp.ne.s32.totalorder %s67, %s83
    %p85 = scmp.eq.s32.totalorder %s19, 0
    %p86 = por %p84, %p85
    %s87 = ssub.s32 %s20, %s32
    %p88 = scmp.eq.s32.totalorder %s87, 0
    %s90 = sadd.s32 %s89, 1
    %s91 = scalar_select %p88, %s89, %s90
    %p94 = pneg %p88
    %p95 = scmp.eq.s32.totalorder %s13, 1
    %p96 = por %p94, %p95
    %p97 = scmp.ne.s32.totalorder %s89, %s92
    %p98 = scmp.eq.s32.totalorder %s13, 0
    %p99 = por %p97, %p98
    %p100 = scmp.ne.s32.totalorder %s89, %s92
    %p101 = scmp.eq.s32.totalorder %s18, 1
    %p102 = por %p100, %p101
    %p103 = scmp.ne.s32.totalorder %s92, %s93
    %p104 = scmp.eq.s32.totalorder %s18, 0
    %p105 = por %p103, %p104
    %p106 = scmp.ne.s32.totalorder %s92, %s93
    %p107 = scmp.eq.s32.totalorder %s19, 1
    %p108 = por %p106, %p107
    %p110 = scmp.ne.s32.totalorder %s93, %s109
    %p111 = scmp.eq.s32.totalorder %s19, 0
    %p112 = por %p110, %p111
    %s113 = ssub.s32 %s20, %s32
    %p114 = scmp.eq.s32.totalorder %s113, 0
    %s116 = sadd.s32 %s115, 1
    %s117 = scalar_select %p114, %s115, %s116
    %p120 = pneg %p114
    %p121 = scmp.eq.s32.totalorder %s13, 1
    %p122 = por %p120, %p121
    %p123 = scmp.ne.s32.totalorder %s115, %s118
    %p124 = scmp.eq.s32.totalorder %s13, 0
    %p125 = por %p123, %p124
    %p126 = scmp.ne.s32.totalorder %s115, %s118
    %p127 = scmp.eq.s32.totalorder %s18, 1
    %p128 = por %p126, %p127
    %p129 = scmp.ne.s32.totalorder %s118, %s119
    %p130 = scmp.eq.s32.totalorder %s18, 0
    %p131 = por %p129, %p130
    %p132 = scmp.ne.s32.totalorder %s118, %s119
    %p133 = scmp.eq.s32.totalorder %s19, 1
    %p134 = por %p132, %p133
    %p136 = scmp.ne.s32.totalorder %s119, %s135
    %p137 = scmp.eq.s32.totalorder %s19, 0
    %p138 = por %p136, %p137
    %s139 = ssub.s32 %s20, %s32
    %p140 = scmp.eq.s32.totalorder %s139, 0
    %s142 = sadd.s32 %s141, 1
    %s143 = scalar_select %p140, %s141, %s142
    %p146 = pneg %p140
    %p147 = scmp.eq.s32.totalorder %s13, 1
    %p148 = por %p146, %p147
    %p149 = scmp.ne.s32.totalorder %s141, %s144
    %p150 = scmp.eq.s32.totalorder %s13, 0
    %p151 = por %p149, %p150
    %p152 = scmp.ne.s32.totalorder %s141, %s144
    %p153 = scmp.eq.s32.totalorder %s18, 1
    %p154 = por %p152, %p153
    %p155 = scmp.ne.s32.totalorder %s144, %s145
    %p156 = scmp.eq.s32.totalorder %s18, 0
    %p157 = por %p155, %p156
    %p158 = scmp.ne.s32.totalorder %s144, %s145
    %p159 = scmp.eq.s32.totalorder %s19, 1
    %p160 = por %p158, %p159
    %p162 = scmp.ne.s32.totalorder %s145, %s161
    %p163 = scmp.eq.s32.totalorder %s19, 0
    %p164 = por %p162, %p163
    %s166 = sadd.s32 %s165, 1
    %p169 = scmp.eq.s32.totalorder %s13, 1
    %p170 = scmp.ne.s32.totalorder %s165, %s167
    %p171 = scmp.eq.s32.totalorder %s13, 0
    %p172 = por %p170, %p171
    %p173 = scmp.ne.s32.totalorder %s165, %s167
    %p174 = scmp.eq.s32.totalorder %s18, 1
    %p175 = por %p173, %p174
    %p176 = scmp.ne.s32.totalorder %s167, %s168
    %p177 = scmp.eq.s32.totalorder %s18, 0
    %p178 = por %p176, %p177
    %p179 = scmp.ne.s32.totalorder %s167, %s168
    %p180 = scmp.eq.s32.totalorder %s19, 1
    %p181 = por %p179, %p180
    %p183 = scmp.ne.s32.totalorder %s168, %s182
    %p184 = scmp.eq.s32.totalorder %s19, 0
    %p185 = por %p183, %p184
    %s187 = sadd.s32 %s186, 1
    %p190 = scmp.eq.s32.totalorder %s13, 1
    %p191 = scmp.ne.s32.totalorder %s186, %s188
    %p192 = scmp.eq.s32.totalorder %s13, 0
    %p193 = por %p191, %p192
    %p194 = scmp.ne.s32.totalorder %s186, %s188
    %p195 = scmp.eq.s32.totalorder %s18, 1
    %p196 = por %p194, %p195
    %p197 = scmp.ne.s32.totalorder %s188, %s189
    %p198 = scmp.eq.s32.totalorder %s18, 0
    %p199 = por %p197, %p198
    %p200 = scmp.ne.s32.totalorder %s188, %s189
    %p201 = scmp.eq.s32.totalorder %s19, 1
    %p202 = por %p200, %p201
    %p204 = scmp.ne.s32.totalorder %s189, %s203
    %p205 = scmp.eq.s32.totalorder %s19, 0
    %p206 = por %p204, %p205
    %s207 = ssub.s32 %s20, %s32
    %s208 = ssub.s32 %s21, %s28
    %s209 = sor.u32 %s207, %s208
    %p210 = scmp.eq.s32.totalorder %s209, 0
    %s212 = sadd.s32 %s211, 1
    %s213 = scalar_select %p210, %s211, %s212
    %p216 = pneg %p210
    %p217 = scmp.eq.s32.totalorder %s13, 1
    %p218 = por %p216, %p217
    %p219 = scmp.ne.s32.totalorder %s211, %s214
    %p220 = scmp.eq.s32.totalorder %s13, 0
    %p221 = por %p219, %p220
    %p222 = scmp.ne.s32.totalorder %s211, %s214
    %p223 = scmp.eq.s32.totalorder %s18, 1
    %p224 = por %p222, %p223
    %p225 = scmp.ne.s32.totalorder %s214, %s215
    %p226 = scmp.eq.s32.totalorder %s18, 0
    %p227 = por %p225, %p226
    %p228 = scmp.ne.s32.totalorder %s214, %s215
    %p229 = scmp.eq.s32.totalorder %s19, 1
    %p230 = por %p228, %p229
    %p232 = scmp.ne.s32.totalorder %s215, %s231
    %p233 = scmp.eq.s32.totalorder %s19, 0
    %p234 = por %p232, %p233
    %p235 = scmp.le.s32.totalorder 1, %s13
    %p236 = scmp.lt.s32.totalorder %s13, 3
    %p237 = pnand %p235, %p236
    %p238 = pneg %p237
    // Predicated region
    $region9: #{tpu_custom_call.1} parent=5 // pred_check
      _
    $region10: #{tpu_custom_call.1} parent=5 // pred_check_branch
      %240 = sbr.rel (%p237) target = $region12
    $region11: #{tpu_custom_call.1} parent=5 // pred_region
      %s241 = ssub.s32 %s13, 1
      // Predicated region
      $region13: #{tpu_custom_call.1} parent=11 // pred_check
        %p242 = pneg %p178
      $region14: #{tpu_custom_call.1} parent=11 // pred_check_branch
        %244 = sbr.rel (%p242) target = $region16
      $region15: #{tpu_custom_call.1} parent=11 // pred_region
        _
      $region16: #{tpu_custom_call.1} parent=11 // pred_fallthru
        _
      // Predicated region
      $region17: #{tpu_custom_call.1} parent=11 // pred_check
        %p245 = pneg %p199
      $region18: #{tpu_custom_call.1} parent=11 // pred_check_branch
        %247 = sbr.rel (%p245) target = $region20
      $region19: #{tpu_custom_call.1} parent=11 // pred_region
        _
      $region20: #{tpu_custom_call.1} parent=11 // pred_fallthru
        _
    $region12: #{tpu_custom_call.1} parent=5 // pred_fallthru
      _
    %p248 = scmp.lt.s32.totalorder %s13, 2
    // Predicated region
    $region21: #{tpu_custom_call.1} parent=5 // pred_check
      %p249 = pneg %p248
    $region22: #{tpu_custom_call.1} parent=5 // pred_check_branch
      %251 = sbr.rel (%p249) target = $region24
    $region23: #{tpu_custom_call.1} parent=5 // pred_region
      // Predicated region
      $region25: #{tpu_custom_call.1} parent=23 // pred_check
        %p252 = pneg %p47
      $region26: #{tpu_custom_call.1} parent=23 // pred_check_branch
        %254 = sbr.rel (%p252) target = $region28
      $region27: #{tpu_custom_call.1} parent=23 // pred_region
        %p255 = scmp.lt.s32.totalorder %s20, 1
        %s256 = scalar_select %p255, %s20, 1
        %p257 = scmp.lt.s32.totalorder %s21, 0
        %s258 = scalar_select %p257, %s21, 0
        %s259 = smul.addr %s258, 2
        %s260 = smul.addr %s256, 2
        %s261 = sadd.s32 %s259, %s260
        %s262 = smul.addr %s261, 4
        %s263 = scalar_lea.vmem %s0, %s262
      $region28: #{tpu_custom_call.1} parent=23 // pred_fallthru
        _
      // Predicated region
      $region29: #{tpu_custom_call.1} parent=23 // pred_check
        %p264 = pneg %p73
      $region30: #{tpu_custom_call.1} parent=23 // pred_check_branch
        %266 = sbr.rel (%p264) target = $region32
      $region31: #{tpu_custom_call.1} parent=23 // pred_region
        %p267 = scmp.lt.s32.totalorder %s20, 1
        %s268 = scalar_select %p267, %s20, 1
        %s269 = smul.addr %s268, 3
        %s270 = smul.addr %s269, 4
        %s271 = scalar_lea.vmem %s1, %s270
      $region32: #{tpu_custom_call.1} parent=23 // pred_fallthru
        _
      // Predicated region
      $region33: #{tpu_custom_call.1} parent=23 // pred_check
        %p272 = pneg %p99
      $region34: #{tpu_custom_call.1} parent=23 // pred_check_branch
        %274 = sbr.rel (%p272) target = $region36
      $region35: #{tpu_custom_call.1} parent=23 // pred_region
        %p275 = scmp.lt.s32.totalorder %s20, 1
        %s276 = scalar_select %p275, %s20, 1
        %s277 = smul.addr %s276, 3
        %s278 = smul.addr %s277, 8
        %s279 = scalar_lea.vmem %s2, %s278
      $region36: #{tpu_custom_call.1} parent=23 // pred_fallthru
        _
      // Predicated region
      $region37: #{tpu_custom_call.1} parent=23 // pred_check
        %p280 = pneg %p125
      $region38: #{tpu_custom_call.1} parent=23 // pred_check_branch
        %282 = sbr.rel (%p280) target = $region40
      $region39: #{tpu_custom_call.1} parent=23 // pred_region
        %p283 = scmp.lt.s32.totalorder %s20, 1
        %s284 = scalar_select %p283, %s20, 1
        %s285 = smul.addr %s284, 4
        %s286 = scalar_lea.vmem %s3, %s285
      $region40: #{tpu_custom_call.1} parent=23 // pred_fallthru
        _
      // Predicated region
      $region41: #{tpu_custom_call.1} parent=23 // pred_check
        %p287 = pneg %p151
      $region42: #{tpu_custom_call.1} parent=23 // pred_check_branch
        %289 = sbr.rel (%p287) target = $region44
      $region43: #{tpu_custom_call.1} parent=23 // pred_region
        %p290 = scmp.lt.s32.totalorder %s20, 1
        %s291 = scalar_select %p290, %s20, 1
        %s292 = smul.addr %s291, 8
        %s293 = scalar_lea.vmem %s4, %s292
      $region44: #{tpu_custom_call.1} parent=23 // pred_fallthru
        _
    $region24: #{tpu_custom_call.1} parent=5 // pred_fallthru
      _
    %p294 = scmp.le.s32.totalorder 1, %s13
    %p295 = scmp.lt.s32.totalorder %s13, 3
    %p296 = pnand %p294, %p295
    %p297 = pneg %p296
    // Predicated region
    $region45: #{tpu_custom_call.1} parent=5 // pred_check
      _
    $region46: #{tpu_custom_call.1} parent=5 // pred_check_branch
      %299 = sbr.rel (%p296) target = $region48
    $region47: #{tpu_custom_call.1} parent=5 // pred_region
      %s300 = ssub.s32 %s13, 1
      %p301 = scmp.lt.s32.totalorder %s22, 1
      %s302 = scalar_select %p301, %s22, 1
      %p303 = scmp.lt.s32.totalorder %s23, 0
      %s304 = scalar_select %p303, %s23, 0
      %s305 = smul.addr %s304, 2
      %s306 = smul.addr %s302, 2
      %s307 = sadd.s32 %s305, %s306
      %s308 = smul.addr %s307, 4
      %s309 = scalar_lea.vmem %s0, %s308
      %p310 = pneg %p53
      %p311 = pneg %p50
      %p312 = scmp.lt.s32.totalorder %s22, 1
      %s313 = scalar_select %p312, %s22, 1
      %s314 = smul.addr %s313, 3
      %s315 = smul.addr %s314, 4
      %s316 = scalar_lea.vmem %s1, %s315
      %p317 = pneg %p79
      %p318 = pneg %p76
      %p319 = scmp.lt.s32.totalorder %s22, 1
      %s320 = scalar_select %p319, %s22, 1
      %s321 = smul.addr %s320, 3
      %s322 = smul.addr %s321, 8
      %s323 = scalar_lea.vmem %s2, %s322
      %p324 = pneg %p105
      %p325 = pneg %p102
      %p326 = scmp.lt.s32.totalorder %s22, 1
      %s327 = scalar_select %p326, %s22, 1
      %s328 = smul.addr %s327, 4
      %s329 = scalar_lea.vmem %s3, %s328
      %p330 = pneg %p131
      %p331 = pneg %p128
      %p332 = scmp.lt.s32.totalorder %s22, 1
      %s333 = scalar_select %p332, %s22, 1
      %s334 = smul.addr %s333, 8
      %s335 = scalar_lea.vmem %s4, %s334
      %p336 = pneg %p157
      %p337 = pneg %p154
      %p338 = pneg %p178
      %p339 = pneg %p175
      %p340 = pneg %p199
      %p341 = pneg %p196
      %p342 = pneg %p227
      %p343 = pneg %p224
      %p344 = scmp.lt.s32.totalorder %s22, 1
      %s345 = scalar_select %p344, %s22, 1
      %p346 = scmp.lt.s32.totalorder %s23, 0
      %s347 = scalar_select %p346, %s23, 0
      %s348 = sadd.s32 %s347, %s345
      %s349 = smul.addr %s348, 8
      %s350 = scalar_lea.vmem %s7, %s349
      %p351 = scmp.lt.s32.totalorder %s22, 1
      %s352 = scalar_select %p351, %s22, 1
      %p353 = scmp.lt.s32.totalorder %s23, 0
      %s354 = scalar_select %p353, %s23, 0
      %s355 = smul.addr %s354, 2
      %s356 = smul.addr %s352, 2
      %s357 = sadd.s32 %s355, %s356
      %s358 = smul.addr %s357, 4
      %s359 = scalar_lea.vmem %s0, %s358
      %p360 = scmp.lt.s32.totalorder %s22, 1
      %s361 = scalar_select %p360, %s22, 1
      %s362 = smul.addr %s361, 3
      %s363 = smul.addr %s362, 4
      %s364 = scalar_lea.vmem %s1, %s363
      %p365 = scmp.lt.s32.totalorder %s22, 1
      %s366 = scalar_select %p365, %s22, 1
      %s367 = smul.addr %s366, 3
      %s368 = smul.addr %s367, 8
      %s369 = scalar_lea.vmem %s2, %s368
      %p370 = scmp.lt.s32.totalorder %s22, 1
      %s371 = scalar_select %p370, %s22, 1
      %s372 = smul.addr %s371, 4
      %s373 = scalar_lea.vmem %s3, %s372
      %p374 = scmp.lt.s32.totalorder %s22, 1
      %s375 = scalar_select %p374, %s22, 1
      %s376 = smul.addr %s375, 8
      %s377 = scalar_lea.vmem %s4, %s376
      %p378 = scmp.lt.s32.totalorder %s22, 1
      %s379 = scalar_select %p378, %s22, 1
      %p380 = scmp.lt.s32.totalorder %s23, 0
      %s381 = scalar_select %p380, %s23, 0
      %s382 = sadd.s32 %s381, %s379
      %s383 = smul.addr %s382, 8
      %s384 = scalar_lea.vmem %s7, %s383
      %v386 = vld [vmem:[%s359] sm:$0xff]
      %v388 = vcombine.high %v386, %v386
      %v390 = vcombine.low %v386, %v386
      %391 = vrot.lane.b32.xlu0 %v390, 127
      %v392 = vpop.permute.xlu0 %391
      %393 = vrot.lane.b32.xlu0 %v386, 127
      %v394 = vpop.permute.xlu0 %393
      %vm395 = vcmask 1039360
      %v396 = vsel %vm395, %v392, %v394
      %399 = vrot.lane.b32.xlu0 %v386, 126
      %v400 = vpop.permute.xlu0 %399
      %401 = vrot.lane.b32.xlu0 %v388, 126
      %v402 = vpop.permute.xlu0 %401
      %vm403 = vcmask 1031168
      %v404 = vsel %vm403, %v400, %v402
      %407 = vrot.lane.b32.xlu0 %v390, 125
      %v408 = vpop.permute.xlu0 %407
      %409 = vrot.lane.b32.xlu0 %v386, 125
      %v410 = vpop.permute.xlu0 %409
      %vm411 = vcmask 1022976
      %v412 = vsel %vm411, %v408, %v410
      %415 = vrot.lane.b32.xlu0 %v386, 124
      %v416 = vpop.permute.xlu0 %415
      %417 = vrot.lane.b32.xlu0 %v388, 124
      %v418 = vpop.permute.xlu0 %417
      %vm419 = vcmask 1014784
      %v420 = vsel %vm419, %v416, %v418
      %423 = vrot.lane.b32.xlu0 %v390, 123
      %v424 = vpop.permute.xlu0 %423
      %425 = vrot.lane.b32.xlu0 %v386, 123
      %v426 = vpop.permute.xlu0 %425
      %vm427 = vcmask 1006592
      %v428 = vsel %vm427, %v424, %v426
      %431 = vrot.lane.b32.xlu0 %v386, 122
      %v432 = vpop.permute.xlu0 %431
      %433 = vrot.lane.b32.xlu0 %v388, 122
      %v434 = vpop.permute.xlu0 %433
      %vm435 = vcmask 998400
      %v436 = vsel %vm435, %v432, %v434
      %439 = vrot.lane.b32.xlu0 %v390, 121
      %v440 = vpop.permute.xlu0 %439
      %441 = vrot.lane.b32.xlu0 %v386, 121
      %v442 = vpop.permute.xlu0 %441
      %vm443 = vcmask 990208
      %v444 = vsel %vm443, %v440, %v442
      %447 = vrot.lane.b32.xlu0 %v386, 120
      %v448 = vpop.permute.xlu0 %447
      %449 = vrot.lane.b32.xlu0 %v388, 120
      %v450 = vpop.permute.xlu0 %449
      %vm451 = vcmask 982016
      %v452 = vsel %vm451, %v448, %v450
      %455 = vrot.lane.b32.xlu0 %v390, 119
      %v456 = vpop.permute.xlu0 %455
      %457 = vrot.lane.b32.xlu0 %v386, 119
      %v458 = vpop.permute.xlu0 %457
      %vm459 = vcmask 973824
      %v460 = vsel %vm459, %v456, %v458
      %vm463 = vcmask 1043456
      %v464 = vsel %vm463, %v386, %v396
      %v465 = vsel %vm463, %v388, %v394
      %v466 = vsel %vm463, %v404, %v412
      %v467 = vsel %vm463, %v402, %v410
      %v468 = vsel %vm463, %v420, %v428
      %v469 = vsel %vm463, %v418, %v426
      %v470 = vsel %vm463, %v436, %v444
      %v471 = vsel %vm463, %v434, %v442
      %v472 = vsel %vm463, %v452, %v460
      %v473 = vsel %vm463, %v450, %v458
      %v474 = vld [vmem:[%s364] sm:$0xf]
      %v475 = vld [vmem:[%s364 + $0x4] sm:$0xf]
      %v476 = vld [vmem:[%s364 + $0x8] sm:$0x3]
      %v477 = vpack.c.bf16 %v466, %v464
      %v478 = vpack.c.bf16 %v467, %v465
      %v479 = vpack.c.bf16 %v470, %v468
      %v480 = vpack.c.bf16 %v471, %v469
      %v481 = vpack.c.bf16 %v472, %v472
      %v482 = vpack.c.bf16 %v473, %v473
      %v483 = vld [vmem:[%s369] sm:$0xff]
      %v484 = vld [vmem:[%s369 + $0x8] sm:$0xff]
      %v485 = vld [vmem:[%s369 + $0x10] sm:$0xf]
      %487 = vset.pattern.permute.xlu0 0
      %488 = vperm.xlu0 %487, %v483
      %v489 = vpop.permute.xlu0 %488
      %492 = vset.pattern.permute.xlu0 0
      %493 = vperm.xlu0 %492, %v484
      %v494 = vpop.permute.xlu0 %493
      %497 = vset.pattern.permute.xlu0 0
      %498 = vperm.xlu0 %497, %v485
      %v499 = vpop.permute.xlu0 %498
      %v504 = vunpack.c.l.b16 %v474
      %v505 = vunpack.c.l.b16 %v475
      %v506 = vunpack.c.l.b16 %v476
      %v507 = vpack.c.b16 %v505, %v504
      %v508 = vpack.c.b16 %v506, %v506
      %vm509 = vcmask 326656
      %v511 = vsel %vm509, %v507, 0
      %v514 = vsel %vm509, %v508, 0
      %v517 = vsel %vm463, %v481, 0
      %v520 = vsel %vm463, %v482, 0
      %522 = vmatprep.subr.bf16.mxu0 0
      %523 = vmatpush1.bf16.msra.mxu0 0
      %524 = vmatprep.subr.bf16.mxu0 0
      %525 = vmatpush1.bf16.msra.mxu0 0
      %526 = vmatprep.subr.bf16.mxu0 0
      %527 = vmatpush1.bf16.msra.mxu0 0
      %528 = vmatprep.subr.bf16.mxu0 0
      %529 = vmatpush1.bf16.msra.mxu0 0
      %530 = vmatprep.subr.bf16.mxu0 0
      %531 = vmatpush1.bf16.msra.mxu0 0
      %532 = vmatprep.subr.bf16.mxu0 %v520
      %533 = vmatpush1.bf16.msra.mxu0 %v517
      %534 = vmatprep.subr.bf16.mxu0 %v480
      %535 = vmatpush1.bf16.msra.mxu0 %v479
      %536 = vmatprep.subr.bf16.mxu0 %v478
      %537 = vmatpush1.bf16.msra.mxu0 %v477
      %538 = vmatprep.subr.bf16.mxu0 0
      %539 = vmatpush2.bf16.msra.mxu0 0
      %540 = vmatprep.subr.bf16.mxu0 0
      %541 = vmatpush2.bf16.msra.mxu0 0
      %542 = vmatprep.subr.bf16.mxu0 0
      %543 = vmatpush2.bf16.msra.mxu0 0
      %544 = vmatprep.subr.bf16.mxu0 0
      %545 = vmatpush2.bf16.msra.mxu0 0
      %546 = vmatprep.subr.bf16.mxu0 0
      %547 = vmatpush2.bf16.msra.mxu0 0
      %548 = vmatprep.subr.bf16.mxu0 0
      %549 = vmatpush2.bf16.msra.mxu0 0
      %550 = vmatprep.subr.bf16.mxu0 0
      %551 = vmatpush2.bf16.msra.mxu0 0
      %552 = vmatprep.subr.bf16.mxu0 0
      %553 = vmatpush2.bf16.msra.mxu0 0
      %554 = vmatprep.mubr.bf16.mxu0 0
      %555 = vmatmul.mubr.bf16.gmra.mxu0 %v511
      %v556 = vpop.f32.mrf.mxu0
      %v557 = vadd.f32 %v489, %v556
      %v558 = vpop.f32.mrf.mxu0
      %v559 = vadd.f32 %v489, %v558
      %v560 = vpop.f32.mrf.mxu0
      %v561 = vadd.f32 %v494, %v560
      %v562 = vpop.f32.mrf.mxu0
      %v563 = vadd.f32 %v494, %v562
      %564 = vmatprep.mubr.bf16.mxu0 0
      %565 = vmatmul.mubr.bf16.gmra.mxu0 %v514
      %v566 = vpop.f32.mrf.mxu0
      %v567 = vadd.f32 %v499, %v566
      %v568 = vpop.f32.mrf.mxu0
      %v569 = vadd.f32 %v499, %v568
      %v570 = vpop.f32.mrf.mxu0
      %v571 = vpop.f32.mrf.mxu0
      %572 = vdwg.mxu0
      %vm573 = vcmp.gt.f32.partialorder %v557, 0.0
      %vm574 = vcmp.gt.f32.partialorder %v559, 0.0
      %vm575 = vcmp.gt.f32.partialorder %v561, 0.0
      %vm576 = vcmp.gt.f32.partialorder %v563, 0.0
      %vm577 = vcmp.gt.f32.partialorder %v567, 0.0
      %vm578 = vcmp.gt.f32.partialorder %v569, 0.0
      %v579 = vmin.f32 %v557, 0.0
      %v580 = vmin.f32 %v559, 0.0
      %v581 = vmin.f32 %v561, 0.0
      %v582 = vmin.f32 %v563, 0.0
      %v583 = vmin.f32 %v567, 0.0
      %v584 = vmin.f32 %v569, 0.0
      %v585 = vmul.f32 %v579, 1.442695
      %v586 = vpow.pop %v585
      %v587 = vmul.f32 %v580, 1.442695
      %v588 = vpow.pop %v587
      %v589 = vmul.f32 %v581, 1.442695
      %v590 = vpow.pop %v589
      %v591 = vmul.f32 %v582, 1.442695
      %v592 = vpow.pop %v591
      %v593 = vmul.f32 %v583, 1.442695
      %v594 = vpow.pop %v593
      %v595 = vmul.f32 %v584, 1.442695
      %v596 = vpow.pop %v595
      %v597 = vsub.f32 %v586, 1.0
      %v598 = vsub.f32 %v588, 1.0
      %v599 = vsub.f32 %v590, 1.0
      %v600 = vsub.f32 %v592, 1.0
      %v601 = vsub.f32 %v594, 1.0
      %v602 = vsub.f32 %v596, 1.0
      %v603 = vsel %vm573, %v557, %v597
      %v604 = vsel %vm574, %v559, %v598
      %v605 = vsel %vm575, %v561, %v599
      %v606 = vsel %vm576, %v563, %v600
      %v607 = vsel %vm577, %v567, %v601
      %v608 = vsel %vm578, %v569, %v602
      %v609 = vpack.c.bf16 %v605, %v603
      %v610 = vpack.c.bf16 %v606, %v604
      %v611 = vpack.c.bf16 %v607, %v607
      %v612 = vpack.c.bf16 %v608, %v608
      %v613 = vld [vmem:[%s5] sm:$0xf]
      %v614 = vld [vmem:[%s5 + $0x4] sm:$0xf]
      %v615 = vld [vmem:[%s5 + $0x8] sm:$0xf]
      %v616 = vld [vmem:[%s5 + $0xc] sm:$0xf]
      %v617 = vld [vmem:[%s5 + $0x10] sm:$0xf]
      %v618 = vld [vmem:[%s5 + $0x14] sm:$0xf]
      %v619 = vld [vmem:[%s5 + $0x18] sm:$0xf]
      %v620 = vld [vmem:[%s5 + $0x1c] sm:$0xf]
      %v621 = vld [vmem:[%s5 + $0x20] sm:$0xf]
      %v622 = vld [vmem:[%s5 + $0x24] sm:$0xf]
      %v623 = vld [vmem:[%s5 + $0x28] sm:$0xf]
      %v624 = vld [vmem:[%s5 + $0x2c] sm:$0xf]
      %v625 = vld [vmem:[%s5 + $0x30] sm:$0xf]
      %v626 = vld [vmem:[%s5 + $0x34] sm:$0xf]
      %v627 = vld [vmem:[%s5 + $0x38] sm:$0xf]
      %v628 = vld [vmem:[%s5 + $0x3c] sm:$0xf]
      %v629 = vld [vmem:[%s5 + $0x40] sm:$0xf]
      %v630 = vld [vmem:[%s5 + $0x44] sm:$0xf]
      %v631 = vld [vmem:[%s5 + $0x48] sm:$0xf]
      %v632 = vld [vmem:[%s5 + $0x4c] sm:$0xf]
      %v633 = vld [vmem:[%s5 + $0x50] sm:$0xf]
      %v634 = vld [vmem:[%s5 + $0x54] sm:$0xf]
      %v635 = vld [vmem:[%s5 + $0x58] sm:$0xf]
      %v659 = vunpack.c.l.b16 %v613
      %v660 = vunpack.c.l.b16 %v614
      %v661 = vunpack.c.l.b16 %v615
      %v662 = vunpack.c.l.b16 %v616
      %v663 = vunpack.c.l.b16 %v617
      %v664 = vunpack.c.l.b16 %v618
      %v665 = vunpack.c.l.b16 %v619
      %v666 = vunpack.c.l.b16 %v620
      %v667 = vunpack.c.l.b16 %v621
      %v668 = vunpack.c.l.b16 %v622
      %v669 = vunpack.c.l.b16 %v623
      %v670 = vunpack.c.l.b16 %v624
      %v671 = vunpack.c.l.b16 %v625
      %v672 = vunpack.c.l.b16 %v626
      %v673 = vunpack.c.l.b16 %v627
      %v674 = vunpack.c.l.b16 %v628
      %v675 = vunpack.c.l.b16 %v629
      %v676 = vunpack.c.l.b16 %v630
      %v677 = vunpack.c.l.b16 %v631
      %v678 = vunpack.c.l.b16 %v632
      %v679 = vunpack.c.l.b16 %v633
      %v680 = vunpack.c.l.b16 %v634
      %v681 = vunpack.c.l.b16 %v635
      %v682 = vpack.c.b16 %v660, %v659
      %v683 = vpack.c.b16 %v662, %v661
      %v684 = vpack.c.b16 %v664, %v663
      %v685 = vpack.c.b16 %v666, %v665
      %v686 = vpack.c.b16 %v668, %v667
      %v687 = vpack.c.b16 %v670, %v669
      %v688 = vpack.c.b16 %v672, %v671
      %v689 = vpack.c.b16 %v674, %v673
      %v690 = vpack.c.b16 %v676, %v675
      %v691 = vpack.c.b16 %v678, %v677
      %v692 = vpack.c.b16 %v680, %v679
      %v693 = vpack.c.b16 %v681, %v681
      %vm705 = vcmask 449536
      %v707 = vsel %vm705, %v610, 0
      %v710 = vsel %vm705, %v612, 0
      %vm712 = vcmask 1042432
      %v713 = vsel %vm712, 4294967295, 65535
      %v714 = vsel %vm463, %v713, 0
      %v716 = vand.u32 %v693, %v714
      %718 = vmatprep.subr.bf16.mxu0 0
      %719 = vmatpush1.bf16.msra.mxu0 %v689
      %720 = vmatprep.subr.bf16.mxu0 0
      %721 = vmatpush1.bf16.msra.mxu0 %v688
      %722 = vmatprep.subr.bf16.mxu0 0
      %723 = vmatpush1.bf16.msra.mxu0 %v687
      %724 = vmatprep.subr.bf16.mxu0 0
      %725 = vmatpush1.bf16.msra.mxu0 %v686
      %726 = vmatprep.subr.bf16.mxu0 0
      %727 = vmatpush1.bf16.msra.mxu0 %v685
      %728 = vmatprep.subr.bf16.mxu0 0
      %729 = vmatpush1.bf16.msra.mxu0 %v684
      %730 = vmatprep.subr.bf16.mxu0 0
      %731 = vmatpush1.bf16.msra.mxu0 %v683
      %732 = vmatprep.subr.bf16.mxu0 0
      %733 = vmatpush1.bf16.msra.mxu0 %v682
      %734 = vmatprep.subr.bf16.mxu0 0
      %735 = vmatpush2.bf16.msra.mxu0 0
      %736 = vmatprep.subr.bf16.mxu0 0
      %737 = vmatpush2.bf16.msra.mxu0 0
      %738 = vmatprep.subr.bf16.mxu0 0
      %739 = vmatpush2.bf16.msra.mxu0 0
      %740 = vmatprep.subr.bf16.mxu0 0
      %741 = vmatpush2.bf16.msra.mxu0 0
      %742 = vmatprep.subr.bf16.mxu0 0
      %743 = vmatpush2.bf16.msra.mxu0 %v716
      %744 = vmatprep.subr.bf16.mxu0 0
      %745 = vmatpush2.bf16.msra.mxu0 %v692
      %746 = vmatprep.subr.bf16.mxu0 0
      %747 = vmatpush2.bf16.msra.mxu0 %v691
      %748 = vmatprep.subr.bf16.mxu0 0
      %749 = vmatpush2.bf16.msra.mxu0 %v690
      %750 = vmatprep.mubr.bf16.mxu0 %v707
      %751 = vmatmul.mubr.bf16.gmra.mxu0 %v609
      %v752 = vpop.f32.mrf.mxu0
      %v753 = vadd.f32 0.0, %v752
      %v754 = vpop.f32.mrf.mxu0
      %v755 = vpop.f32.mrf.mxu0
      %v756 = vadd.f32 0.0, %v755
      %v757 = vpop.f32.mrf.mxu0
      %758 = vmatprep.mubr.bf16.mxu0 %v710
      %759 = vmatmul.mubr.bf16.gmra.mxu0 %v611
      %v760 = vpop.f32.mrf.mxu0
      %v761 = vadd.f32 0.0, %v760
      %v762 = vpop.f32.mrf.mxu0
      %v763 = vpop.f32.mrf.mxu0
      %v764 = vpop.f32.mrf.mxu0
      %765 = vdwg.mxu0
      %v769 = vrot.slane %v753, 4
      %v770 = vrot.slane %v756, 4
      %v771 = vsel %vm463, %v769, %v770
      %v772 = vrot.slane %v761, 4
      %v773 = vsel %vm463, %v770, %v772
      %774 = vrot.lane.b32.xlu0 %v769, 127
      %v775 = vpop.permute.xlu0 %774
      %776 = vrot.lane.b32.xlu0 %v771, 127
      %v777 = vpop.permute.xlu0 %776
      %778 = vrot.lane.b32.xlu0 %v773, 127
      %v779 = vpop.permute.xlu0 %778
      %783 = vrot.lane.b32.xlu0 %v753, 126
      %v784 = vpop.permute.xlu0 %783
      %785 = vrot.lane.b32.xlu0 %v756, 126
      %v786 = vpop.permute.xlu0 %785
      %787 = vrot.lane.b32.xlu0 %v761, 126
      %v788 = vpop.permute.xlu0 %787
      %792 = vrot.lane.b32.xlu0 %v769, 125
      %v793 = vpop.permute.xlu0 %792
      %794 = vrot.lane.b32.xlu0 %v771, 125
      %v795 = vpop.permute.xlu0 %794
      %796 = vrot.lane.b32.xlu0 %v773, 125
      %v797 = vpop.permute.xlu0 %796
      %v801 = vsel %vm463, %v761, %v775
      %v802 = vsel %vm463, %v788, %v793
      %v803 = vld [vmem:[%s373] sm:$0x7]
      %v804 = vpack.c.bf16 %v756, %v753
      %v805 = vpack.c.bf16 %v777, %v801
      %v806 = vpack.c.bf16 %v784, %v779
      %v807 = vpack.c.bf16 %v802, %v786
      %v808 = vpack.c.bf16 %v797, %v795
      %v809 = vld [vmem:[%s377] sm:$0x1f]
      %811 = vset.pattern.permute.xlu0 0
      %812 = vperm.xlu0 %811, %v809
      %v813 = vpop.permute.xlu0 %812
      %vm815 = vcmask 654336
      %v817 = vsel %vm815, %v803, 0
      %819 = vmatprep.subr.bf16.mxu0 0
      %820 = vmatpush1.bf16.msra.mxu0 0
      %821 = vmatprep.subr.bf16.mxu0 0
      %822 = vmatpush1.bf16.msra.mxu0 0
      %823 = vmatprep.subr.bf16.mxu0 0
      %824 = vmatpush1.bf16.msra.mxu0 0
      %825 = vmatprep.subr.bf16.mxu0 0
      %826 = vmatpush1.bf16.msra.mxu0 %v808
      %827 = vmatprep.subr.bf16.mxu0 0
      %828 = vmatpush1.bf16.msra.mxu0 %v807
      %829 = vmatprep.subr.bf16.mxu0 0
      %830 = vmatpush1.bf16.msra.mxu0 %v806
      %831 = vmatprep.subr.bf16.mxu0 0
      %832 = vmatpush1.bf16.msra.mxu0 %v805
      %833 = vmatprep.subr.bf16.mxu0 0
      %834 = vmatpush1.bf16.msra.mxu0 %v804
      %835 = vmatprep.subr.bf16.mxu0 0
      %836 = vmatpush2.bf16.msra.mxu0 0
      %837 = vmatprep.subr.bf16.mxu0 0
      %838 = vmatpush2.bf16.msra.mxu0 0
      %839 = vmatprep.subr.bf16.mxu0 0
      %840 = vmatpush2.bf16.msra.mxu0 0
      %841 = vmatprep.subr.bf16.mxu0 0
      %842 = vmatpush2.bf16.msra.mxu0 0
      %843 = vmatprep.subr.bf16.mxu0 0
      %844 = vmatpush2.bf16.msra.mxu0 0
      %845 = vmatprep.subr.bf16.mxu0 0
      %846 = vmatpush2.bf16.msra.mxu0 0
      %847 = vmatprep.subr.bf16.mxu0 0
      %848 = vmatpush2.bf16.msra.mxu0 0
      %849 = vmatprep.subr.bf16.mxu0 0
      %850 = vmatpush2.bf16.msra.mxu0 0
      %851 = vmatprep.mubr.bf16.mxu0 0
      %852 = vmatmul.mubr.bf16.gmra.mxu0 %v817
      %v853 = vpop.f32.mrf.mxu0
      %v854 = vadd.f32 %v813, %v853
      %v855 = vpop.f32.mrf.mxu0
      %v856 = vpop.f32.mrf.mxu0
      %v857 = vpop.f32.mrf.mxu0
      %858 = vdwg.mxu0
      %vm859 = vcmp.gt.f32.partialorder %v854, 0.0
      %v860 = vmin.f32 %v854, 0.0
      %v861 = vmul.f32 %v860, 1.442695
      %v862 = vpow.pop %v861
      %v863 = vsub.f32 %v862, 1.0
      %v864 = vsel %vm859, %v854, %v863
      %v865 = vpack.c.bf16 %v864, %v864
      %v866 = vld [vmem:[%s6] sm:$0xf]
      %v867 = vld [vmem:[%s6 + $0x4] sm:$0xf]
      %v868 = vld [vmem:[%s6 + $0x8] sm:$0xf]
      %v869 = vld [vmem:[%s6 + $0xc] sm:$0xf]
      %v870 = vld [vmem:[%s6 + $0x10] sm:$0x3]
      %v876 = vunpack.c.l.b16 %v866
      %v877 = vunpack.c.l.b16 %v867
      %v878 = vunpack.c.l.b16 %v868
      %v879 = vunpack.c.l.b16 %v869
      %v880 = vunpack.c.l.b16 %v870
      %v881 = vpack.c.b16 %v877, %v876
      %v882 = vpack.c.b16 %v879, %v878
      %v883 = vpack.c.b16 %v880, %v880
      %vm886 = vcmask 285696
      %v888 = vsel %vm886, %v865, 0
      %vm890 = vcmask 1040384
      %vm891 = vcmask 1041408
      %v892 = vsel %vm890, 4294967295, 65535
      %v893 = vsel %vm891, %v892, 0
      %v895 = vand.u32 %v883, %v893
      %897 = vmatprep.subr.bf16.mxu0 0
      %898 = vmatpush1.bf16.msra.mxu0 0
      %899 = vmatprep.subr.bf16.mxu0 0
      %900 = vmatpush1.bf16.msra.mxu0 0
      %901 = vmatprep.subr.bf16.mxu0 0
      %902 = vmatpush1.bf16.msra.mxu0 0
      %903 = vmatprep.subr.bf16.mxu0 0
      %904 = vmatpush1.bf16.msra.mxu0 0
      %905 = vmatprep.subr.bf16.mxu0 0
      %906 = vmatpush1.bf16.msra.mxu0 0
      %907 = vmatprep.subr.bf16.mxu0 0
      %908 = vmatpush1.bf16.msra.mxu0 %v895
      %909 = vmatprep.subr.bf16.mxu0 0
      %910 = vmatpush1.bf16.msra.mxu0 %v882
      %911 = vmatprep.subr.bf16.mxu0 0
      %912 = vmatpush1.bf16.msra.mxu0 %v881
      %913 = vmatprep.subr.bf16.mxu0 0
      %914 = vmatpush2.bf16.msra.mxu0 0
      %915 = vmatprep.subr.bf16.mxu0 0
      %916 = vmatpush2.bf16.msra.mxu0 0
      %917 = vmatprep.subr.bf16.mxu0 0
      %918 = vmatpush2.bf16.msra.mxu0 0
      %919 = vmatprep.subr.bf16.mxu0 0
      %920 = vmatpush2.bf16.msra.mxu0 0
      %921 = vmatprep.subr.bf16.mxu0 0
      %922 = vmatpush2.bf16.msra.mxu0 0
      %923 = vmatprep.subr.bf16.mxu0 0
      %924 = vmatpush2.bf16.msra.mxu0 0
      %925 = vmatprep.subr.bf16.mxu0 0
      %926 = vmatpush2.bf16.msra.mxu0 0
      %927 = vmatprep.subr.bf16.mxu0 0
      %928 = vmatpush2.bf16.msra.mxu0 0
      %929 = vmatprep.mubr.bf16.mxu0 0
      %930 = vmatmul.mubr.bf16.gmra.mxu0 %v888
      %v931 = vpop.f32.mrf.mxu0
      %v932 = vadd.f32 0.0, %v931
      %v933 = vpop.f32.mrf.mxu0
      %v934 = vpop.f32.mrf.mxu0
      %v935 = vpop.f32.mrf.mxu0
      %936 = vdwg.mxu0
      %vm937 = vcmask 94208
      %938 = vst.msk [vmem:[%s384] sm:$0x1f] %vm937, %v932
      %p939 = scmp.lt.s32.totalorder %s22, 1
      %s940 = scalar_select %p939, %s22, 1
      %p941 = scmp.lt.s32.totalorder %s23, 0
      %s942 = scalar_select %p941, %s23, 0
      %s943 = sadd.s32 %s942, %s940
      %s944 = smul.addr %s943, 8
      %s945 = scalar_lea.vmem %s7, %s944
      // Predicated region
      $region49: #{tpu_custom_call.1} parent=47 // pred_check
        %p946 = pneg %p224
      $region50: #{tpu_custom_call.1} parent=47 // pred_check_branch
        %948 = sbr.rel (%p946) target = $region52
      $region51: #{tpu_custom_call.1} parent=47 // pred_region
        _
      $region52: #{tpu_custom_call.1} parent=47 // pred_fallthru
        _
    $region48: #{tpu_custom_call.1} parent=5 // pred_fallthru
      _
    %p949 = scmp.le.s32.totalorder 2, %s13
    // Predicated region
    $region53: #{tpu_custom_call.1} parent=5 // pred_check
      %p950 = pneg %p949
    $region54: #{tpu_custom_call.1} parent=5 // pred_check_branch
      %952 = sbr.rel (%p950) target = $region56
    $region55: #{tpu_custom_call.1} parent=5 // pred_region
      %s953 = ssub.s32 %s13, 2
      // Predicated region
      $region57: #{tpu_custom_call.1} parent=55 // pred_check
        %p954 = pneg %p230
      $region58: #{tpu_custom_call.1} parent=55 // pred_check_branch
        %956 = sbr.rel (%p954) target = $region60
      $region59: #{tpu_custom_call.1} parent=55 // pred_region
        %p957 = scmp.lt.s32.totalorder %s24, 1
        %s958 = scalar_select %p957, %s24, 1
        %p959 = scmp.lt.s32.totalorder %s25, 0
        %s960 = scalar_select %p959, %s25, 0
        %s961 = sadd.s32 %s960, %s958
        %s962 = smul.addr %s961, 8
        %s963 = scalar_lea.vmem %s7, %s962
      $region60: #{tpu_custom_call.1} parent=55 // pred_fallthru
        _
    $region56: #{tpu_custom_call.1} parent=5 // pred_fallthru
      _
  $region6: #{tpu_custom_call.1} parent=0 // loop_footer
    %s17 = sadd.s32 1, %s13
  $region7: #{tpu_custom_call.1} parent=0 // loop_footer_branch
    %12 = sbr.rel target = $region3
  $region8: #{tpu_custom_call.1} parent=0 // loop_exit
    _

</llo_original>
